<compile_context>
chip_gen: v6e
topology: v6e:2x2x1
jax: 0.10.0
libtpu: 0.0.40
codegen_flags: <defaults>
</compile_context>

<pallas_src>
import functools

import jax
import jax.numpy as jnp
from jax.experimental import pallas as pl
from jax.experimental.pallas import tpu as pltpu


def _round_up(x, m):
    return (x + m - 1) // m * m


def _cdiv(a, b):
    return (a + b - 1) // b


def _loss_kernel(phi_ref, meta_ref, dec_ref, tgt_ref, out_ref, acc_ref, *,
                 alpha, t_bins, n_sub, t_pack, n_phi_rows, n_mse_rows,
                 inv_b, inv_bd):
    c = pl.program_id(0)
    j = pl.program_id(1)
    chunk = c * pl.num_programs(1) + j

    @pl.when(j == 0)
    def _():
        acc_ref[0] = jnp.float32(0.0)

    # ---------------- survival (NLLLogistiHazard) term -----------------------
    phi = phi_ref[...].astype(jnp.float32)                   # (tbp, t_pack)
    tbp = phi.shape[0]
    meta = meta_ref[...].astype(jnp.float32)                  # (tbp, 2*n_sub)

    # Broadcast the per-sample columns [idx + sub*T | events] to per-lane
    # values with one tiny MXU matmul against a 0/1 indicator built from iota.
    two_f = 2 * n_sub
    two_tp = 2 * t_pack
    s_i = jax.lax.broadcasted_iota(jnp.int32, (two_f, two_tp), 0)
    l_i = jax.lax.broadcasted_iota(jnp.int32, (two_f, two_tp), 1)
    ind = ((l_i >= s_i * t_bins) & (l_i < (s_i + 1) * t_bins)).astype(jnp.float32)
    lane_meta = jnp.dot(meta, ind,
                        precision=jax.lax.Precision.HIGHEST,
                        preferred_element_type=jnp.float32)   # (tbp, 2*t_pack)
    idxb = lane_meta[:, :t_pack]     # idx + sub*T, replicated over that sample's T lanes
    ev = lane_meta[:, t_pack:]       # events,      replicated over that sample's T lanes

    lane = jax.lax.broadcasted_iota(jnp.int32, (tbp, t_pack), 1).astype(jnp.float32)
    rows_p = jax.lax.broadcasted_iota(jnp.int32, (tbp, 1), 0) + chunk * tbp
    ok_p = rows_p < n_phi_rows       # mask rows of (possibly empty) partial blocks

    # stable softplus(phi) = max(phi, 0) + log1p(exp(-|phi|))
    sp = jnp.maximum(phi, 0.0) + jnp.log1p(jnp.exp(-jnp.abs(phi)))
    # sum_{j<=d} BCEwithLogits(phi, y) = sum_{j<=d} softplus(phi) - ev * phi[:, d]
    surv_tile = (jnp.where((lane <= idxb) & ok_p, sp, 0.0)
                 - jnp.where((lane == idxb) & ok_p, ev * phi, 0.0))
    surv_sum = jnp.sum(surv_tile)

    # ---------------- MSE term (lane-dense flattened layout) -----------------
    diff = dec_ref[...].astype(jnp.float32) - tgt_ref[...].astype(jnp.float32)
    tbm = diff.shape[0]
    rows_m = jax.lax.broadcasted_iota(jnp.int32, (tbm, 1), 0) + chunk * tbm
    ok_m = rows_m < n_mse_rows
    ae_sum = jnp.sum(jnp.where(ok_m, diff * diff, 0.0))

    acc_ref[0] += alpha * inv_b * surv_sum + (1.0 - alpha) * inv_bd * ae_sum

    @pl.when(j == pl.num_programs(1) - 1)
    def _():
        out_ref[...] = jnp.full((8, 128), acc_ref[0], dtype=jnp.float32)


def loss_ae_loghaz(phi, decoded, target_loghaz, target_ae, alpha,
                   *, _max_chunk_bytes=None):
    """JAX/Pallas equivalent of LossAELogHaz(alpha).forward(...)."""
    assert 0.0 <= alpha <= 1.0, "Need `alpha` in [0, 1]."
    idx_durations, events = target_loghaz
    assert phi.ndim == 2
    assert decoded.shape == target_ae.shape
    B, T = phi.shape
    n_ae = int(decoded.size)

    # ---- survival-side lane packing: fold f = 128 // T samples per row -----
    f = max(1, 128 // T) if T <= 128 else 1
    t_pack = f * T
    Bp = _round_up(B, f)
    Rp = Bp // f

    # TODO(synk): pycox's gather raises on idx_durations outside [0, T-1];
    # here out-of-range indices are clipped to the valid range instead.
    idx_f = jnp.clip(idx_durations.reshape(-1).astype(jnp.int32), 0, T - 1
                     ).astype(jnp.float32)
    ev_f = events.reshape(-1).astype(jnp.float32)
    phi_p = phi
    if Bp != B:
        idx_f = jnp.pad(idx_f, (0, Bp - B), constant_values=-1.0)  # -1 => no lane selected
        ev_f = jnp.pad(ev_f, (0, Bp - B))
        phi_p = jnp.pad(phi_p, ((0, Bp - B), (0, 0)))
    # per-sample columns: [idx + sub*T | events]; broadcast to lanes in-kernel (MXU)
    idx_p = idx_f.reshape(Rp, f) + (jnp.arange(f, dtype=jnp.float32) * T)[None, :]
    meta = jnp.concatenate([idx_p, ev_f.reshape(Rp, f)], axis=1)   # (Rp, 2f) f32
    phi_p = phi_p.reshape(Rp, t_pack)                              # lane-dense phi

    # ---- MSE-side lane packing: flatten to (Rm, W), W a multiple of 128 ----
    dec_flat = decoded.reshape(-1)
    tgt_flat = target_ae.reshape(-1)
    W = next((w for w in (512, 256, 128) if n_ae % w == 0), None)
    if W is None:
        W = 128
        pad_amt = _round_up(n_ae, W) - n_ae
        dec_flat = jnp.pad(dec_flat, (0, pad_amt))   # zero pad both -> diff contributes 0
        tgt_flat = jnp.pad(tgt_flat, (0, pad_amt))
    dec_p = dec_flat.reshape(-1, W)
    tgt_p = tgt_flat.reshape(-1, W)
    Rm = dec_p.shape[0]

    # ---- generation-aware tiling ----
    try:
        vmem_cap = int(getattr(pltpu.get_tpu_info(), "vmem_capacity_bytes", 64 << 20))
    except Exception:
        vmem_cap = 64 << 20
    budget = _max_chunk_bytes or max(4 << 20, min(vmem_cap // 3, 40 << 20))

    phi_b = phi.dtype.itemsize
    ae_b = dec_p.dtype.itemsize + tgt_p.dtype.itemsize

    def _chunk_cost(n):
        tbp_ = _round_up(_cdiv(Rp, n), 8)
        tbm_ = _round_up(_cdiv(Rm, n), 8)
        in_bytes = (tbp_ * (_round_up(t_pack, 128) * phi_b + 128 * 4)
                    + tbm_ * W * ae_b)
        work_bytes = tbp_ * (8 * 128 * 4) + tbm_ * (4 * W * 4)  # f32 intermediates
        return 2 * in_bytes + work_bytes                         # double-buffered inputs

    n_cap = max(_cdiv(Rp, 8), _cdiv(Rm, 8))
    n_chunks = min(n_cap, max(1, _cdiv(_chunk_cost(1), budget)))
    while _chunk_cost(n_chunks) > budget and n_chunks < n_cap:
        n_chunks += 1

    # Leading "parallel" axis -> both TensorCores on megacore parts (v7x).
    n_outer = 2 if n_chunks > 1 else 1
    n_inner = _cdiv(n_chunks, n_outer)
    n_total = n_outer * n_inner

    tbp = _round_up(_cdiv(Rp, n_total), 8)
    tbm = _round_up(_cdiv(Rm, n_total), 8)
    p_last = max(_cdiv(Rp, tbp) - 1, 0)   # extra (empty) chunks re-read the last
    m_last = max(_cdiv(Rm, tbm) - 1, 0)   # block; their rows are masked out.

    vmem_limit = int(min(vmem_cap,
                         max(32 << 20, _chunk_cost(n_total) + (8 << 20))))

    def phi_map(c, j):
        return (jnp.minimum(c * n_inner + j, p_last), 0)

    def mse_map(c, j):
        return (jnp.minimum(c * n_inner + j, m_last), 0)

    kernel = functools.partial(
        _loss_kernel, alpha=float(alpha), t_bins=T, n_sub=f, t_pack=t_pack,
        n_phi_rows=Rp, n_mse_rows=Rm, inv_b=1.0 / B, inv_bd=1.0 / n_ae)

    out = pl.pallas_call(
        kernel,
        out_shape=jax.ShapeDtypeStruct((n_outer * 8, 128), jnp.float32),
        grid=(n_outer, n_inner),
        in_specs=[
            pl.BlockSpec((tbp, t_pack), phi_map),   # phi, lane-packed, native dtype
            pl.BlockSpec((tbp, 2 * f), phi_map),    # [idx + sub*T | events] columns
            pl.BlockSpec((tbm, W), mse_map),        # decoded, lane-dense, native dtype
            pl.BlockSpec((tbm, W), mse_map),        # target_ae, lane-dense, native dtype
        ],
        out_specs=pl.BlockSpec((8, 128), lambda c, j: (c, 0)),
        scratch_shapes=[pltpu.SMEM((1,), jnp.float32)],
        compiler_params=pltpu.CompilerParams(
            dimension_semantics=("parallel", "arbitrary"),
            vmem_limit_bytes=vmem_limit),
    )(phi_p, meta, dec_p, tgt_p)

    return jnp.sum(out.reshape(n_outer, 8, 128)[:, 0, 0])


def _reference(phi, decoded, target_loghaz, target_ae, alpha):
    """Pure-JAX reference mirroring pycox NLLLogistiHazardLoss + nn.MSELoss."""
    idx_durations, events = target_loghaz
    phi = phi.astype(jnp.float32)
    B, T = phi.shape
    cols = jnp.arange(T)[None, :]
    idx = jnp.clip(idx_durations.reshape(-1).astype(jnp.int32), 0, T - 1).reshape(-1, 1)
    y = jnp.where(cols == idx, events.reshape(-1, 1).astype(jnp.float32), 0.0)
    bce = jnp.maximum(phi, 0.0) - phi * y + jnp.log1p(jnp.exp(-jnp.abs(phi)))
    per_sample = jnp.take_along_axis(jnp.cumsum(bce, axis=1), idx, axis=1)[:, 0]
    loss_surv = jnp.mean(per_sample)
    diff = decoded.astype(jnp.float32) - target_ae.astype(jnp.float32)
    loss_ae = jnp.mean(diff * diff)
    return alpha * loss_surv + (1.0 - alpha) * loss_ae


if __name__ == "__main__":
    key = jax.random.PRNGKey(0)
    k = jax.random.split(key, 16)
    alpha = 0.7

    # --- Test 1: small fp32 case, single chunk, fully dense packing ----------
    B, T, D = 64, 16, 64
    phi = jax.random.normal(k[0], (B, T), dtype=jnp.float32)
    decoded = jax.random.normal(k[1], (B, D), dtype=jnp.float32)
    target_ae = jax.random.normal(k[2], (B, D), dtype=jnp.float32)
    idx_durations = jax.random.randint(k[3], (B,), 0, T, dtype=jnp.int32)
    events = jax.random.bernoulli(k[4], 0.5, (B,)).astype(jnp.float32)

    loss = jax.block_until_ready(
        loss_ae_loghaz(phi, decoded, (idx_durations, events), target_ae, alpha))
    ref = _reference(phi, decoded, (idx_durations, events), target_ae, alpha)
    assert jnp.allclose(loss, ref, rtol=1e-5, atol=1e-5), (loss, ref)

    # --- Test 2: bf16 inputs, ragged batch (partial blocks + packed-row pad) -
    B2, D2 = 2100, 32
    phi2 = jax.random.normal(k[5], (B2, T), dtype=jnp.float32).astype(jnp.bfloat16)
    dec2 = jax.random.normal(k[6], (B2, D2), dtype=jnp.float32).astype(jnp.bfloat16)
    tgt2 = jax.random.normal(k[7], (B2, D2), dtype=jnp.float32).astype(jnp.bfloat16)
    idx2 = jax.random.randint(k[8], (B2,), 0, T, dtype=jnp.int32)
    ev2 = jax.random.bernoulli(k[9], 0.5, (B2,)).astype(jnp.float32)

    loss2 = jax.block_until_ready(
        loss_ae_loghaz(phi2, dec2, (idx2, ev2), tgt2, alpha))
    ref2 = _reference(phi2, dec2, (idx2, ev2), tgt2, alpha)
    assert jnp.allclose(loss2, ref2, rtol=1e-4, atol=1e-4), (loss2, ref2)

    # --- Test 3: forced multi-chunk grid (dual "parallel" axis, clamped maps)
    B3, D3 = 300, 32
    phi3 = jax.random.normal(k[10], (B3, T), dtype=jnp.float32)
    dec3 = jax.random.normal(k[11], (B3, D3), dtype=jnp.float32)
    tgt3 = jax.random.normal(k[12], (B3, D3), dtype=jnp.float32)
    idx3 = jax.random.randint(k[13], (B3,), 0, T, dtype=jnp.int32)
    ev3 = jax.random.bernoulli(k[14], 0.5, (B3,)).astype(jnp.float32)

    loss3 = jax.block_until_ready(
        loss_ae_loghaz(phi3, dec3, (idx3, ev3), tgt3, 0.3,
                       _max_chunk_bytes=32 * 1024))
    ref3 = _reference(phi3, dec3, (idx3, ev3), tgt3, 0.3)
    assert jnp.allclose(loss3, ref3, rtol=1e-5, atol=1e-5), (loss3, ref3)

    print("KERNEL_OK")
</pallas_src>

<mosaic_0001>
module attributes {stable_mosaic.version = 11 : i64} {
  func.func @_loss_kernel(%arg0: i32, %arg1: i32, %arg2: memref<8x128xf32, #tpu.memory_space<vmem>>, %arg3: memref<8x16xf32, #tpu.memory_space<vmem>>, %arg4: memref<8x512xf32, #tpu.memory_space<vmem>>, %arg5: memref<8x512xf32, #tpu.memory_space<vmem>>, %arg6: memref<8x128xf32, #tpu.memory_space<vmem>>, %arg7: memref<1xf32, #tpu.memory_space<smem>>) attributes {dimension_semantics = [#tpu.dimension_semantics<parallel>, #tpu.dimension_semantics<arbitrary>], iteration_bounds = array<i64: 1, 1>, scalar_prefetch = 0 : i64, scratch_operands = 1 : i64, tpu.core_type = #tpu.core_type<tc>, window_params = [{transform_indices = @transform_0, window_bounds = array<i64: 8, 128>}, {transform_indices = @transform_1, window_bounds = array<i64: 8, 16>}, {transform_indices = @transform_2, window_bounds = array<i64: 8, 512>}, {transform_indices = @transform_3, window_bounds = array<i64: 8, 512>}, {transform_indices = @transform_4, window_bounds = array<i64: 8, 128>}]} {
    %c1_i32 = arith.constant 1 : i32
    %0 = arith.muli %arg0, %c1_i32 : i32
    %1 = arith.addi %0, %arg1 : i32
    %c0_i32 = arith.constant 0 : i32
    %2 = arith.cmpi eq, %arg1, %c0_i32 : i32
    %3 = arith.extui %2 : i1 to i32
    %c0_i32_0 = arith.constant 0 : i32
    %4 = arith.cmpi ne, %3, %c0_i32_0 : i32
    scf.if %4 {
      %cst_26 = arith.constant 0.000000e+00 : f32
      %c0_27 = arith.constant 0 : index
      %82 = memref.load %arg7[%c0_27] : memref<1xf32, #tpu.memory_space<smem>>
      memref.store %cst_26, %arg7[%c0_27] : memref<1xf32, #tpu.memory_space<smem>>
    } else {
    }
    %c0 = arith.constant 0 : index
    %c0_1 = arith.constant 0 : index
    %5 = vector.load %arg2[%c0, %c0_1] : memref<8x128xf32, #tpu.memory_space<vmem>>, vector<8x128xf32>
    %c0_2 = arith.constant 0 : index
    %c0_3 = arith.constant 0 : index
    %6 = vector.load %arg3[%c0_2, %c0_3] : memref<8x16xf32, #tpu.memory_space<vmem>>, vector<8x16xf32>
    %7 = tpu.iota {dimensions = array<i32: 0>} : vector<16x256xi32>
    %8 = tpu.iota {dimensions = array<i32: 1>} : vector<16x256xi32>
    %c16_i32 = arith.constant 16 : i32
    %9 = vector.broadcast %c16_i32 : i32 to vector<16x256xi32>
    %10 = arith.muli %7, %9 : vector<16x256xi32>
    %11 = arith.cmpi sge, %8, %10 : vector<16x256xi32>
    %c1_i32_4 = arith.constant 1 : i32
    %12 = vector.broadcast %c1_i32_4 : i32 to vector<16x256xi32>
    %13 = arith.addi %7, %12 : vector<16x256xi32>
    %c16_i32_5 = arith.constant 16 : i32
    %14 = vector.broadcast %c16_i32_5 : i32 to vector<16x256xi32>
    %15 = arith.muli %13, %14 : vector<16x256xi32>
    %16 = arith.cmpi slt, %8, %15 : vector<16x256xi32>
    %17 = arith.andi %11, %16 : vector<16x256xi1>
    %18 = arith.extui %17 : vector<16x256xi1> to vector<16x256xi32>
    %19 = arith.sitofp %18 : vector<16x256xi32> to vector<16x256xf32>
    %cst = arith.constant dense<0.000000e+00> : vector<8x256xf32>
    %20 = tpu.matmul %6, %19, %cst {dimension_numbers = #tpu.dot_dimension_numbers<[1], [0], [0], [1], [0, 0, 1, 1], [], []>, precision = #tpu.contract_precision<fp32>} : vector<8x16xf32>, vector<16x256xf32>, vector<8x256xf32> -> vector<8x256xf32>
    %21 = vector.extract_strided_slice %20 {offsets = [0, 0], sizes = [8, 128], strides = [1, 1]} : vector<8x256xf32> to vector<8x128xf32>
    %22 = vector.extract_strided_slice %20 {offsets = [0, 128], sizes = [8, 128], strides = [1, 1]} : vector<8x256xf32> to vector<8x128xf32>
    %23 = tpu.iota {dimensions = array<i32: 1>} : vector<8x128xi32>
    %24 = arith.sitofp %23 : vector<8x128xi32> to vector<8x128xf32>
    %25 = tpu.iota {dimensions = array<i32: 0>} : vector<8x1xi32>
    %c8_i32 = arith.constant 8 : i32
    %26 = arith.muli %1, %c8_i32 : i32
    %27 = vector.broadcast %26 : i32 to vector<8x1xi32>
    %28 = arith.addi %25, %27 : vector<8x1xi32>
    %c8_i32_6 = arith.constant 8 : i32
    %29 = vector.broadcast %c8_i32_6 : i32 to vector<8x1xi32>
    %30 = arith.cmpi slt, %28, %29 : vector<8x1xi32>
    %cst_7 = arith.constant 0.000000e+00 : f32
    %31 = vector.broadcast %cst_7 : f32 to vector<8x128xf32>
    %32 = arith.maximumf %5, %31 : vector<8x128xf32>
    %33 = math.absf %5 : vector<8x128xf32>
    %cst_8 = arith.constant 0.000000e+00 : f32
    %34 = vector.broadcast %cst_8 : f32 to vector<8x128xf32>
    %35 = arith.subf %34, %33 : vector<8x128xf32>
    %36 = math.exp %35 : vector<8x128xf32>
    %37 = math.log1p %36 : vector<8x128xf32>
    %38 = arith.addf %32, %37 : vector<8x128xf32>
    %39 = arith.cmpf ole, %24, %21 : vector<8x128xf32>
    %40 = vector.broadcast %30 : vector<8x1xi1> to vector<8x128xi1>
    %41 = arith.andi %39, %40 : vector<8x128xi1>
    %cst_9 = arith.constant 0.000000e+00 : f32
    %42 = vector.broadcast %cst_9 : f32 to vector<8x128xf32>
    %43 = arith.select %41, %38, %42 : vector<8x128xi1>, vector<8x128xf32>
    %44 = arith.cmpf oeq, %24, %21 : vector<8x128xf32>
    %45 = vector.broadcast %30 : vector<8x1xi1> to vector<8x128xi1>
    %46 = arith.andi %44, %45 : vector<8x128xi1>
    %47 = arith.mulf %22, %5 : vector<8x128xf32>
    %cst_10 = arith.constant 0.000000e+00 : f32
    %48 = vector.broadcast %cst_10 : f32 to vector<8x128xf32>
    %49 = arith.select %46, %47, %48 : vector<8x128xi1>, vector<8x128xf32>
    %50 = arith.subf %43, %49 : vector<8x128xf32>
    %51 = vector.shape_cast %50 : vector<8x128xf32> to vector<1x8x128xf32>
    %cst_11 = arith.constant dense<0.000000e+00> : vector<1xf32>
    %52 = vector.multi_reduction <add>, %51, %cst_11 [1, 2] : vector<1x8x128xf32> to vector<1xf32>
    %53 = vector.shape_cast %52 : vector<1xf32> to vector<1x1x1xf32>
    %54 = vector.extract %53[0, 0, 0] : f32 from vector<1x1x1xf32>
    %c0_12 = arith.constant 0 : index
    %c0_13 = arith.constant 0 : index
    %55 = vector.load %arg4[%c0_12, %c0_13] : memref<8x512xf32, #tpu.memory_space<vmem>>, vector<8x512xf32>
    %c0_14 = arith.constant 0 : index
    %c0_15 = arith.constant 0 : index
    %56 = vector.load %arg5[%c0_14, %c0_15] : memref<8x512xf32, #tpu.memory_space<vmem>>, vector<8x512xf32>
    %57 = arith.subf %55, %56 : vector<8x512xf32>
    %58 = tpu.iota {dimensions = array<i32: 0>} : vector<8x1xi32>
    %c8_i32_16 = arith.constant 8 : i32
    %59 = arith.muli %1, %c8_i32_16 : i32
    %60 = vector.broadcast %59 : i32 to vector<8x1xi32>
    %61 = arith.addi %58, %60 : vector<8x1xi32>
    %c8_i32_17 = arith.constant 8 : i32
    %62 = vector.broadcast %c8_i32_17 : i32 to vector<8x1xi32>
    %63 = arith.cmpi slt, %61, %62 : vector<8x1xi32>
    %64 = arith.mulf %57, %57 : vector<8x512xf32>
    %cst_18 = arith.constant 0.000000e+00 : f32
    %65 = vector.shape_cast %63 : vector<8x1xi1> to vector<8x1xi1>
    %66 = vector.broadcast %65 : vector<8x1xi1> to vector<8x512xi1>
    %67 = vector.broadcast %cst_18 : f32 to vector<8x512xf32>
    %68 = arith.select %66, %64, %67 : vector<8x512xi1>, vector<8x512xf32>
    %69 = vector.shape_cast %68 : vector<8x512xf32> to vector<1x8x512xf32>
    %cst_19 = arith.constant dense<0.000000e+00> : vector<1xf32>
    %70 = vector.multi_reduction <add>, %69, %cst_19 [1, 2] : vector<1x8x512xf32> to vector<1xf32>
    %71 = vector.shape_cast %70 : vector<1xf32> to vector<1x1x1xf32>
    %72 = vector.extract %71[0, 0, 0] : f32 from vector<1x1x1xf32>
    %c0_20 = arith.constant 0 : index
    %73 = memref.load %arg7[%c0_20] : memref<1xf32, #tpu.memory_space<smem>>
    %cst_21 = arith.constant 1.093750e-02 : f32
    %74 = arith.mulf %cst_21, %54 : f32
    %cst_22 = arith.constant 7.32421904E-5 : f32
    %75 = arith.mulf %cst_22, %72 : f32
    %76 = arith.addf %74, %75 : f32
    %77 = arith.addf %73, %76 : f32
    %c0_23 = arith.constant 0 : index
    %78 = memref.load %arg7[%c0_23] : memref<1xf32, #tpu.memory_space<smem>>
    memref.store %77, %arg7[%c0_23] : memref<1xf32, #tpu.memory_space<smem>>
    %c0_i32_24 = arith.constant 0 : i32
    %79 = arith.cmpi eq, %arg1, %c0_i32_24 : i32
    %80 = arith.extui %79 : i1 to i32
    %c0_i32_25 = arith.constant 0 : i32
    %81 = arith.cmpi ne, %80, %c0_i32_25 : i32
    scf.if %81 {
      %c0_26 = arith.constant 0 : index
      %82 = memref.load %arg7[%c0_26] : memref<1xf32, #tpu.memory_space<smem>>
      %83 = vector.broadcast %82 : f32 to vector<8x128xf32>
      %c0_27 = arith.constant 0 : index
      %c0_28 = arith.constant 0 : index
      %84 = vector.load %arg6[%c0_27, %c0_28] : memref<8x128xf32, #tpu.memory_space<vmem>>, vector<8x128xf32>
      tpu.vector_store %arg6[%c0_27, %c0_28], %83 {strides = array<i32>} : memref<8x128xf32, #tpu.memory_space<vmem>>, vector<8x128xf32>,
    } else {
    }
    return
  }
  func.func @transform_0(%arg0: i32, %arg1: i32) -> (i32, i32) {
    %c1_i32 = arith.constant 1 : i32
    %0 = arith.muli %arg0, %c1_i32 : i32
    %1 = arith.addi %0, %arg1 : i32
    %c0_i32 = arith.constant 0 : i32
    %2 = arith.minsi %1, %c0_i32 : i32
    %c0_i32_0 = arith.constant 0 : i32
    %c0_i32_1 = arith.constant 0 : i32
    return %2, %c0_i32_0 : i32, i32
  }
  func.func @transform_1(%arg0: i32, %arg1: i32) -> (i32, i32) {
    %c1_i32 = arith.constant 1 : i32
    %0 = arith.muli %arg0, %c1_i32 : i32
    %1 = arith.addi %0, %arg1 : i32
    %c0_i32 = arith.constant 0 : i32
    %2 = arith.minsi %1, %c0_i32 : i32
    %c0_i32_0 = arith.constant 0 : i32
    %c0_i32_1 = arith.constant 0 : i32
    return %2, %c0_i32_0 : i32, i32
  }
  func.func @transform_2(%arg0: i32, %arg1: i32) -> (i32, i32) {
    %c1_i32 = arith.constant 1 : i32
    %0 = arith.muli %arg0, %c1_i32 : i32
    %1 = arith.addi %0, %arg1 : i32
    %c0_i32 = arith.constant 0 : i32
    %2 = arith.minsi %1, %c0_i32 : i32
    %c0_i32_0 = arith.constant 0 : i32
    %c0_i32_1 = arith.constant 0 : i32
    return %2, %c0_i32_0 : i32, i32
  }
  func.func @transform_3(%arg0: i32, %arg1: i32) -> (i32, i32) {
    %c1_i32 = arith.constant 1 : i32
    %0 = arith.muli %arg0, %c1_i32 : i32
    %1 = arith.addi %0, %arg1 : i32
    %c0_i32 = arith.constant 0 : i32
    %2 = arith.minsi %1, %c0_i32 : i32
    %c0_i32_0 = arith.constant 0 : i32
    %c0_i32_1 = arith.constant 0 : i32
    return %2, %c0_i32_0 : i32, i32
  }
  func.func @transform_4(%arg0: i32, %arg1: i32) -> (i32, i32) {
    %c0_i32 = arith.constant 0 : i32
    %c0_i32_0 = arith.constant 0 : i32
    return %arg0, %c0_i32 : i32, i32
  }
}

</mosaic_0001>

<llo_original>
// kernel: tpu_custom_call.1
$region0: #{tpu_custom_call.1}
  #allocation0 [shape = 'u32[]', space=smem, size = 0x4, offset = 0x4, fixed_abs, tag = 'smem constant byte address 0x4 - core index']
  #allocation1 [shape = 'u32[144,128]{1,0:T(1,128)}', space=vmem, size = 0x12000, scoped, tag = 'internal scratch']
  #allocation2 [shape = 'f32[1]{0:T(128)}', space=smem, size = 0x200, scoped, tag = 'scratch operand']
  %s0 = inlined_call_operand.hbm [shape: f32[8,128], index: 0, kind: input, shape index: {}]
  %s1 = inlined_call_operand.hbm [shape: f32[8,16], index: 1, kind: input, shape index: {}]
  %s2 = inlined_call_operand.hbm [shape: f32[8,512], index: 2, kind: input, shape index: {}]
  %s3 = inlined_call_operand.hbm [shape: f32[8,512], index: 3, kind: input, shape index: {}]
  %s4 = inlined_call_operand.hbm [shape: f32[8,128], index: 4, kind: output, shape index: {}]
  %s5 = sld [smem:[#allocation0]]
  $region50: #{tpu_custom_call.1} parent=0
    _
  %s7 = ssub.s32 1, %s5
  %s8 = scalar_select 0, %s7, %s5
  $region1: #{tpu_custom_call.1} parent=0
    #allocation3 [shape = 'u8[4096]{0}', space=vmem, size = 0x1000, scoped, tag = 'input window, operand 0, single buffered']
    #allocation4 [shape = 's32[1]{0}', space=sflag, size = 0x4, scoped, tag = 'scoped memory for tpu_custom_call.1']
    #allocation5 [shape = 's32[1]{0}', space=sflag, size = 0x4, scoped, tag = 'scoped memory for tpu_custom_call.1']
    #allocation6 [shape = 'u8[4096]{0}', space=vmem, size = 0x1000, scoped, tag = 'input window, operand 1, single buffered']
    #allocation7 [shape = 's32[1]{0}', space=sflag, size = 0x4, scoped, tag = 'scoped memory for tpu_custom_call.1']
    #allocation8 [shape = 'u8[16384]{0}', space=vmem, size = 0x4000, scoped, tag = 'input window, operand 2, single buffered']
    #allocation9 [shape = 'u8[16384]{0}', space=vmem, size = 0x4000, scoped, tag = 'input window, operand 3, single buffered']
    #allocation10 [shape = 's32[1]{0}', space=sflag, size = 0x4, scoped, tag = 'scoped memory for tpu_custom_call.1']
    #allocation11 [shape = 'u8[4096]{0}', space=vmem, size = 0x1000, scoped, tag = 'output window, operand 0, single buffered']
    %9 = vsyncpa [#allocation4], 0
    %10 = vsyncpa [#allocation7], 0
    %11 = vsyncpa [#allocation10], 0
    %12 = vsyncpa [#allocation5], 0
    // Predicated region
    $region2: #{tpu_custom_call.1} parent=1 // pred_check
      _
    $region3: #{tpu_custom_call.1} parent=1 // pred_check_branch
      %14 = sbr.rel (0) target = $region5
    $region4: #{tpu_custom_call.1} parent=1 // pred_region
      %s15 = sadd.s32 0, 0
      %p16 = scmp.lt.s32.totalorder %s15, 0
      %s17 = scalar_select %p16, %s15, 0
      %s19 = ssub.s32 128, 128
      %20 = vsyncadd [#allocation4], %s19
      %s21 = smul.addr %s17, 128
      %s22 = scalar_lea.hbm %s0, %s21
      %s24 = sshll.u32 [#allocation3], 4
      %s25 = int_to_ptr.vmem [resolvable:$true] %s24
      %27 = dma.hbm_to_vmem [thread:$0]  %s22, 128, %s25, [#allocation4]
    $region5: #{tpu_custom_call.1} parent=1 // pred_fallthru
      _
    // Predicated region
    $region6: #{tpu_custom_call.1} parent=1 // pred_check
      _
    $region7: #{tpu_custom_call.1} parent=1 // pred_check_branch
      %29 = sbr.rel (0) target = $region9
    $region8: #{tpu_custom_call.1} parent=1 // pred_region
      %s30 = sadd.s32 0, 0
      %p31 = scmp.lt.s32.totalorder %s30, 0
      %s32 = scalar_select %p31, %s30, 0
      %s34 = ssub.s32 128, 128
      %35 = vsyncadd [#allocation7], %s34
      %s36 = smul.addr %s32, 128
      %s37 = scalar_lea.hbm %s1, %s36
      %s39 = sshll.u32 [#allocation6], 4
      %s40 = int_to_ptr.vmem [resolvable:$true] %s39
      %42 = dma.hbm_to_vmem [thread:$0]  %s37, 128, %s40, [#allocation7]
    $region9: #{tpu_custom_call.1} parent=1 // pred_fallthru
      _
    // Predicated region
    $region10: #{tpu_custom_call.1} parent=1 // pred_check
      _
    $region11: #{tpu_custom_call.1} parent=1 // pred_check_branch
      %44 = sbr.rel (0) target = $region13
    $region12: #{tpu_custom_call.1} parent=1 // pred_region
      %s45 = sadd.s32 0, 0
      %p46 = scmp.lt.s32.totalorder %s45, 0
      %s47 = scalar_select %p46, %s45, 0
      %s49 = ssub.s32 512, 512
      %50 = vsyncadd [#allocation7], %s49
      %s51 = smul.addr %s47, 4
      %s52 = smul.addr %s51, 128
      %s53 = scalar_lea.hbm %s2, %s52
      %s55 = sshll.u32 [#allocation8], 4
      %s56 = int_to_ptr.vmem [resolvable:$true] %s55
      %58 = dma.hbm_to_vmem [thread:$0]  %s53, 512, %s56, [#allocation7]
    $region13: #{tpu_custom_call.1} parent=1 // pred_fallthru
      _
    // Predicated region
    $region14: #{tpu_custom_call.1} parent=1 // pred_check
      _
    $region15: #{tpu_custom_call.1} parent=1 // pred_check_branch
      %60 = sbr.rel (0) target = $region17
    $region16: #{tpu_custom_call.1} parent=1 // pred_region
      %s61 = sadd.s32 0, 0
      %p62 = scmp.lt.s32.totalorder %s61, 0
      %s63 = scalar_select %p62, %s61, 0
      %s65 = ssub.s32 512, 512
      %66 = vsyncadd [#allocation10], %s65
      %s67 = smul.addr %s63, 4
      %s68 = smul.addr %s67, 128
      %s69 = scalar_lea.hbm %s3, %s68
      %s71 = sshll.u32 [#allocation9], 4
      %s72 = int_to_ptr.vmem [resolvable:$true] %s71
      %74 = dma.hbm_to_vmem [thread:$0]  %s69, 512, %s72, [#allocation10]
    $region17: #{tpu_custom_call.1} parent=1 // pred_fallthru
      _
    // Predicated region
    $region18: #{tpu_custom_call.1} parent=1 // pred_check
      _
    $region19: #{tpu_custom_call.1} parent=1 // pred_check_branch
      %76 = sbr.rel (0) target = $region21
    $region20: #{tpu_custom_call.1} parent=1 // pred_region
      %77 = dma.done [#allocation4], 128
    $region21: #{tpu_custom_call.1} parent=1 // pred_fallthru
      _
    // Predicated region
    $region22: #{tpu_custom_call.1} parent=1 // pred_check
      _
    $region23: #{tpu_custom_call.1} parent=1 // pred_check_branch
      %79 = sbr.rel (0) target = $region25
    $region24: #{tpu_custom_call.1} parent=1 // pred_region
      %80 = dma.done [#allocation7], 128
    $region25: #{tpu_custom_call.1} parent=1 // pred_fallthru
      _
    // Predicated region
    $region26: #{tpu_custom_call.1} parent=1 // pred_check
      _
    $region27: #{tpu_custom_call.1} parent=1 // pred_check_branch
      %82 = sbr.rel (0) target = $region29
    $region28: #{tpu_custom_call.1} parent=1 // pred_region
      %83 = dma.done [#allocation7], 512
    $region29: #{tpu_custom_call.1} parent=1 // pred_fallthru
      _
    // Predicated region
    $region30: #{tpu_custom_call.1} parent=1 // pred_check
      _
    $region31: #{tpu_custom_call.1} parent=1 // pred_check_branch
      %85 = sbr.rel (0) target = $region33
    $region32: #{tpu_custom_call.1} parent=1 // pred_region
      %86 = dma.done [#allocation10], 512
    $region33: #{tpu_custom_call.1} parent=1 // pred_fallthru
      _
    %s87 = sadd.s32 0, 0
    %p88 = scmp.lt.s32.totalorder %s87, 0
    %s89 = scalar_select %p88, %s87, 0
    %s90 = sadd.s32 0, 0
    %p91 = scmp.lt.s32.totalorder %s90, 0
    %s92 = scalar_select %p91, %s90, 0
    %s93 = sadd.s32 0, 0
    %p94 = scmp.lt.s32.totalorder %s93, 0
    %s95 = scalar_select %p94, %s93, 0
    %s96 = sadd.s32 0, 0
    %p97 = scmp.lt.s32.totalorder %s96, 0
    %s98 = scalar_select %p97, %s96, 0
    %s99 = sadd.s32 0, 0
    %p100 = scmp.eq.s32.totalorder 0, 0
    // Predicated region
    $region34: #{tpu_custom_call.1} parent=1 // pred_check
      %p101 = pneg %p100
    $region35: #{tpu_custom_call.1} parent=1 // pred_check_branch
      %103 = sbr.rel (%p101) target = $region37
    $region36: #{tpu_custom_call.1} parent=1 // pred_region
      %s104 = scalar_lea.smem [#allocation2], 0
      %105 = sst [smem:[%s104]] 0.0
    $region37: #{tpu_custom_call.1} parent=1 // pred_fallthru
      _
    %v106 = vld [vmem:[#allocation3] sm:$0xff]
    %v107 = vld [vmem:[#allocation6] sm:$0xff]
    %v108 = vlaneseq
    %v109 = vshrl.u32 %v108, 7
    %v110 = vadd.s32 %v109, 8
    %v111 = vlaneseq
    %v112 = vand.u32 %v111, 127
    %v113 = vadd.s32 %v112, 128
    %v114 = vmul.u32 %v109, 16
    %v115 = vmul.u32 %v110, 16
    %vm116 = vcmp.ge.s32.totalorder %v112, %v114
    %vm117 = vcmp.ge.s32.totalorder %v113, %v114
    %vm118 = vcmp.ge.s32.totalorder %v112, %v115
    %vm119 = vcmp.ge.s32.totalorder %v113, %v115
    %v120 = vadd.s32 %v109, 1
    %v121 = vadd.s32 %v110, 1
    %v122 = vmul.u32 %v120, 16
    %v123 = vmul.u32 %v121, 16
    %vm124 = vcmp.lt.s32.totalorder %v112, %v122
    %vm125 = vcmp.lt.s32.totalorder %v113, %v122
    %vm126 = vcmp.lt.s32.totalorder %v112, %v123
    %vm127 = vcmp.lt.s32.totalorder %v113, %v123
    %vm128 = vmand %vm116, %vm124
    %vm129 = vmand %vm117, %vm125
    %vm130 = vmand %vm118, %vm126
    %vm131 = vmand %vm119, %vm127
    %v132 = vsel %vm128, 1, 0
    %v133 = vsel %vm129, 1, 0
    %v134 = vsel %vm130, 1, 0
    %v135 = vsel %vm131, 1, 0
    %v136 = vcvt.s32.f32 %v132
    %v137 = vcvt.s32.f32 %v133
    %v138 = vcvt.s32.f32 %v134
    %v139 = vcvt.s32.f32 %v135
    %vm140 = vcmask 130048
    %v142 = vsel %vm140, %v107, 0
    %144 = vmatprep.subr.mxu0 0.0
    %145 = vmatpush1.msra.mxu0 0.0
    %146 = vmatprep.subr.mxu0 0.0
    %147 = vmatpush1.msra.mxu0 0.0
    %148 = vmatprep.subr.mxu0 0.0
    %149 = vmatpush1.msra.mxu0 0.0
    %150 = vmatprep.subr.mxu0 0.0
    %151 = vmatpush1.msra.mxu0 0.0
    %152 = vmatprep.subr.mxu0 0.0
    %153 = vmatpush1.msra.mxu0 0.0
    %154 = vmatprep.subr.mxu0 0.0
    %155 = vmatpush1.msra.mxu0 0.0
    %156 = vmatprep.subr.mxu0 0.0
    %157 = vmatpush1.msra.mxu0 0.0
    %158 = vmatprep.subr.mxu0 0.0
    %159 = vmatpush1.msra.mxu0 0.0
    %160 = vmatprep.subr.mxu0 0.0
    %161 = vmatpush1.msra.mxu0 0.0
    %162 = vmatprep.subr.mxu0 0.0
    %163 = vmatpush1.msra.mxu0 0.0
    %164 = vmatprep.subr.mxu0 0.0
    %165 = vmatpush1.msra.mxu0 0.0
    %166 = vmatprep.subr.mxu0 0.0
    %167 = vmatpush1.msra.mxu0 0.0
    %168 = vmatprep.subr.mxu0 0.0
    %169 = vmatpush1.msra.mxu0 0.0
    %170 = vmatprep.subr.mxu0 0.0
    %171 = vmatpush1.msra.mxu0 0.0
    %v172 = vand.u32 %v139, 4294901760
    %173 = vmatprep.subr.mxu0 %v172
    %v174 = vand.u32 %v138, 4294901760
    %175 = vmatpush1.msra.mxu0 %v174
    %v176 = vand.u32 %v137, 4294901760
    %177 = vmatprep.subr.mxu0 %v176
    %v178 = vand.u32 %v136, 4294901760
    %179 = vmatpush1.msra.mxu0 %v178
    %180 = vmatprep.subr.mxu0 0.0
    %181 = vmatpush2.msra.mxu0 0.0
    %182 = vmatprep.subr.mxu0 0.0
    %183 = vmatpush2.msra.mxu0 0.0
    %184 = vmatprep.subr.mxu0 0.0
    %185 = vmatpush2.msra.mxu0 0.0
    %186 = vmatprep.subr.mxu0 0.0
    %187 = vmatpush2.msra.mxu0 0.0
    %188 = vmatprep.subr.mxu0 0.0
    %189 = vmatpush2.msra.mxu0 0.0
    %190 = vmatprep.subr.mxu0 0.0
    %191 = vmatpush2.msra.mxu0 0.0
    %192 = vmatprep.subr.mxu0 0.0
    %193 = vmatpush2.msra.mxu0 0.0
    %194 = vmatprep.subr.mxu0 0.0
    %195 = vmatpush2.msra.mxu0 0.0
    %196 = vmatprep.subr.mxu0 0.0
    %197 = vmatpush2.msra.mxu0 0.0
    %198 = vmatprep.subr.mxu0 0.0
    %199 = vmatpush2.msra.mxu0 0.0
    %200 = vmatprep.subr.mxu0 0.0
    %201 = vmatpush2.msra.mxu0 0.0
    %202 = vmatprep.subr.mxu0 0.0
    %203 = vmatpush2.msra.mxu0 0.0
    %204 = vmatprep.subr.mxu0 0.0
    %205 = vmatpush2.msra.mxu0 0.0
    %206 = vmatprep.subr.mxu0 0.0
    %207 = vmatpush2.msra.mxu0 0.0
    %208 = vmatprep.subr.mxu0 0.0
    %209 = vmatpush2.msra.mxu0 0.0
    %210 = vmatprep.subr.mxu0 0.0
    %211 = vmatpush2.msra.mxu0 0.0
    %212 = vmatprep.mubr.f32.mxu0 0.0
    %v213 = vand.u32 %v142, 4294901760
    %v214 = vsub.f32 %v142, %v213
    %v215 = vand.u32 %v214, 4294901760
    %v216 = vsub.f32 %v214, %v215
    %v217 = vand.u32 %v216, 4294901760
    %218 = vmatmul.mubr.f32.gmra.mxu0 %v217
    %v219 = vpop.f32.mrf.mxu0
    %v220 = vadd.f32 0.0, %v219
    %v221 = vpop.f32.mrf.mxu0
    %v222 = vadd.f32 0.0, %v221
    %223 = vdwg.mxu0
    %224 = vmatprep.subr.mxu0 0.0
    %225 = vmatpush1.msra.mxu0 0.0
    %226 = vmatprep.subr.mxu0 0.0
    %227 = vmatpush1.msra.mxu0 0.0
    %228 = vmatprep.subr.mxu0 0.0
    %229 = vmatpush1.msra.mxu0 0.0
    %230 = vmatprep.subr.mxu0 0.0
    %231 = vmatpush1.msra.mxu0 0.0
    %232 = vmatprep.subr.mxu0 0.0
    %233 = vmatpush1.msra.mxu0 0.0
    %234 = vmatprep.subr.mxu0 0.0
    %235 = vmatpush1.msra.mxu0 0.0
    %236 = vmatprep.subr.mxu0 0.0
    %237 = vmatpush1.msra.mxu0 0.0
    %238 = vmatprep.subr.mxu0 0.0
    %239 = vmatpush1.msra.mxu0 0.0
    %240 = vmatprep.subr.mxu0 0.0
    %241 = vmatpush1.msra.mxu0 0.0
    %242 = vmatprep.subr.mxu0 0.0
    %243 = vmatpush1.msra.mxu0 0.0
    %244 = vmatprep.subr.mxu0 0.0
    %245 = vmatpush1.msra.mxu0 0.0
    %246 = vmatprep.subr.mxu0 0.0
    %247 = vmatpush1.msra.mxu0 0.0
    %248 = vmatprep.subr.mxu0 0.0
    %249 = vmatpush1.msra.mxu0 0.0
    %250 = vmatprep.subr.mxu0 0.0
    %251 = vmatpush1.msra.mxu0 0.0
    %v252 = vand.u32 %v139, 4294901760
    %v253 = vsub.f32 %v139, %v252
    %v254 = vand.u32 %v253, 4294901760
    %v255 = vsub.f32 %v253, %v254
    %v256 = vand.u32 %v255, 4294901760
    %257 = vmatprep.subr.mxu0 %v256
    %v258 = vand.u32 %v138, 4294901760
    %v259 = vsub.f32 %v138, %v258
    %v260 = vand.u32 %v259, 4294901760
    %v261 = vsub.f32 %v259, %v260
    %v262 = vand.u32 %v261, 4294901760
    %263 = vmatpush1.msra.mxu0 %v262
    %v264 = vand.u32 %v137, 4294901760
    %v265 = vsub.f32 %v137, %v264
    %v266 = vand.u32 %v265, 4294901760
    %v267 = vsub.f32 %v265, %v266
    %v268 = vand.u32 %v267, 4294901760
    %269 = vmatprep.subr.mxu0 %v268
    %v270 = vand.u32 %v136, 4294901760
    %v271 = vsub.f32 %v136, %v270
    %v272 = vand.u32 %v271, 4294901760
    %v273 = vsub.f32 %v271, %v272
    %v274 = vand.u32 %v273, 4294901760
    %275 = vmatpush1.msra.mxu0 %v274
    %276 = vmatprep.subr.mxu0 0.0
    %277 = vmatpush2.msra.mxu0 0.0
    %278 = vmatprep.subr.mxu0 0.0
    %279 = vmatpush2.msra.mxu0 0.0
    %280 = vmatprep.subr.mxu0 0.0
    %281 = vmatpush2.msra.mxu0 0.0
    %282 = vmatprep.subr.mxu0 0.0
    %283 = vmatpush2.msra.mxu0 0.0
    %284 = vmatprep.subr.mxu0 0.0
    %285 = vmatpush2.msra.mxu0 0.0
    %286 = vmatprep.subr.mxu0 0.0
    %287 = vmatpush2.msra.mxu0 0.0
    %288 = vmatprep.subr.mxu0 0.0
    %289 = vmatpush2.msra.mxu0 0.0
    %290 = vmatprep.subr.mxu0 0.0
    %291 = vmatpush2.msra.mxu0 0.0
    %292 = vmatprep.subr.mxu0 0.0
    %293 = vmatpush2.msra.mxu0 0.0
    %294 = vmatprep.subr.mxu0 0.0
    %295 = vmatpush2.msra.mxu0 0.0
    %296 = vmatprep.subr.mxu0 0.0
    %297 = vmatpush2.msra.mxu0 0.0
    %298 = vmatprep.subr.mxu0 0.0
    %299 = vmatpush2.msra.mxu0 0.0
    %300 = vmatprep.subr.mxu0 0.0
    %301 = vmatpush2.msra.mxu0 0.0
    %302 = vmatprep.subr.mxu0 0.0
    %303 = vmatpush2.msra.mxu0 0.0
    %304 = vmatprep.subr.mxu0 0.0
    %305 = vmatpush2.msra.mxu0 0.0
    %306 = vmatprep.subr.mxu0 0.0
    %307 = vmatpush2.msra.mxu0 0.0
    %308 = vmatprep.mubr.f32.mxu0 0.0
    %v309 = vand.u32 %v142, 4294901760
    %310 = vmatmul.mubr.f32.gmra.mxu0 %v309
    %v311 = vpop.f32.mrf.mxu0
    %v312 = vadd.f32 %v220, %v311
    %v313 = vpop.f32.mrf.mxu0
    %v314 = vadd.f32 %v222, %v313
    %315 = vdwg.mxu0
    %316 = vmatprep.subr.mxu0 0.0
    %317 = vmatpush1.msra.mxu0 0.0
    %318 = vmatprep.subr.mxu0 0.0
    %319 = vmatpush1.msra.mxu0 0.0
    %320 = vmatprep.subr.mxu0 0.0
    %321 = vmatpush1.msra.mxu0 0.0
    %322 = vmatprep.subr.mxu0 0.0
    %323 = vmatpush1.msra.mxu0 0.0
    %324 = vmatprep.subr.mxu0 0.0
    %325 = vmatpush1.msra.mxu0 0.0
    %326 = vmatprep.subr.mxu0 0.0
    %327 = vmatpush1.msra.mxu0 0.0
    %328 = vmatprep.subr.mxu0 0.0
    %329 = vmatpush1.msra.mxu0 0.0
    %330 = vmatprep.subr.mxu0 0.0
    %331 = vmatpush1.msra.mxu0 0.0
    %332 = vmatprep.subr.mxu0 0.0
    %333 = vmatpush1.msra.mxu0 0.0
    %334 = vmatprep.subr.mxu0 0.0
    %335 = vmatpush1.msra.mxu0 0.0
    %336 = vmatprep.subr.mxu0 0.0
    %337 = vmatpush1.msra.mxu0 0.0
    %338 = vmatprep.subr.mxu0 0.0
    %339 = vmatpush1.msra.mxu0 0.0
    %340 = vmatprep.subr.mxu0 0.0
    %341 = vmatpush1.msra.mxu0 0.0
    %342 = vmatprep.subr.mxu0 0.0
    %343 = vmatpush1.msra.mxu0 0.0
    %v344 = vand.u32 %v139, 4294901760
    %v345 = vsub.f32 %v139, %v344
    %346 = vmatprep.subr.mxu0 %v345
    %v347 = vand.u32 %v138, 4294901760
    %v348 = vsub.f32 %v138, %v347
    %349 = vmatpush1.msra.mxu0 %v348
    %v350 = vand.u32 %v137, 4294901760
    %v351 = vsub.f32 %v137, %v350
    %352 = vmatprep.subr.mxu0 %v351
    %v353 = vand.u32 %v136, 4294901760
    %v354 = vsub.f32 %v136, %v353
    %355 = vmatpush1.msra.mxu0 %v354
    %356 = vmatprep.subr.mxu0 0.0
    %357 = vmatpush2.msra.mxu0 0.0
    %358 = vmatprep.subr.mxu0 0.0
    %359 = vmatpush2.msra.mxu0 0.0
    %360 = vmatprep.subr.mxu0 0.0
    %361 = vmatpush2.msra.mxu0 0.0
    %362 = vmatprep.subr.mxu0 0.0
    %363 = vmatpush2.msra.mxu0 0.0
    %364 = vmatprep.subr.mxu0 0.0
    %365 = vmatpush2.msra.mxu0 0.0
    %366 = vmatprep.subr.mxu0 0.0
    %367 = vmatpush2.msra.mxu0 0.0
    %368 = vmatprep.subr.mxu0 0.0
    %369 = vmatpush2.msra.mxu0 0.0
    %370 = vmatprep.subr.mxu0 0.0
    %371 = vmatpush2.msra.mxu0 0.0
    %372 = vmatprep.subr.mxu0 0.0
    %373 = vmatpush2.msra.mxu0 0.0
    %374 = vmatprep.subr.mxu0 0.0
    %375 = vmatpush2.msra.mxu0 0.0
    %376 = vmatprep.subr.mxu0 0.0
    %377 = vmatpush2.msra.mxu0 0.0
    %378 = vmatprep.subr.mxu0 0.0
    %379 = vmatpush2.msra.mxu0 0.0
    %380 = vmatprep.subr.mxu0 0.0
    %381 = vmatpush2.msra.mxu0 0.0
    %382 = vmatprep.subr.mxu0 0.0
    %383 = vmatpush2.msra.mxu0 0.0
    %384 = vmatprep.subr.mxu0 0.0
    %385 = vmatpush2.msra.mxu0 0.0
    %386 = vmatprep.subr.mxu0 0.0
    %387 = vmatpush2.msra.mxu0 0.0
    %388 = vmatprep.mubr.f32.mxu0 0.0
    %v389 = vand.u32 %v142, 4294901760
    %v390 = vsub.f32 %v142, %v389
    %391 = vmatmul.mubr.f32.gmra.mxu0 %v390
    %v392 = vpop.f32.mrf.mxu0
    %v393 = vadd.f32 %v312, %v392
    %v394 = vpop.f32.mrf.mxu0
    %v395 = vadd.f32 %v314, %v394
    %396 = vdwg.mxu0
    %397 = vmatprep.subr.mxu0 0.0
    %398 = vmatpush1.msra.mxu0 0.0
    %399 = vmatprep.subr.mxu0 0.0
    %400 = vmatpush1.msra.mxu0 0.0
    %401 = vmatprep.subr.mxu0 0.0
    %402 = vmatpush1.msra.mxu0 0.0
    %403 = vmatprep.subr.mxu0 0.0
    %404 = vmatpush1.msra.mxu0 0.0
    %405 = vmatprep.subr.mxu0 0.0
    %406 = vmatpush1.msra.mxu0 0.0
    %407 = vmatprep.subr.mxu0 0.0
    %408 = vmatpush1.msra.mxu0 0.0
    %409 = vmatprep.subr.mxu0 0.0
    %410 = vmatpush1.msra.mxu0 0.0
    %411 = vmatprep.subr.mxu0 0.0
    %412 = vmatpush1.msra.mxu0 0.0
    %413 = vmatprep.subr.mxu0 0.0
    %414 = vmatpush1.msra.mxu0 0.0
    %415 = vmatprep.subr.mxu0 0.0
    %416 = vmatpush1.msra.mxu0 0.0
    %417 = vmatprep.subr.mxu0 0.0
    %418 = vmatpush1.msra.mxu0 0.0
    %419 = vmatprep.subr.mxu0 0.0
    %420 = vmatpush1.msra.mxu0 0.0
    %421 = vmatprep.subr.mxu0 0.0
    %422 = vmatpush1.msra.mxu0 0.0
    %423 = vmatprep.subr.mxu0 0.0
    %424 = vmatpush1.msra.mxu0 0.0
    %v425 = vand.u32 %v139, 4294901760
    %426 = vmatprep.subr.mxu0 %v425
    %v427 = vand.u32 %v138, 4294901760
    %428 = vmatpush1.msra.mxu0 %v427
    %v429 = vand.u32 %v137, 4294901760
    %430 = vmatprep.subr.mxu0 %v429
    %v431 = vand.u32 %v136, 4294901760
    %432 = vmatpush1.msra.mxu0 %v431
    %433 = vmatprep.subr.mxu0 0.0
    %434 = vmatpush2.msra.mxu0 0.0
    %435 = vmatprep.subr.mxu0 0.0
    %436 = vmatpush2.msra.mxu0 0.0
    %437 = vmatprep.subr.mxu0 0.0
    %438 = vmatpush2.msra.mxu0 0.0
    %439 = vmatprep.subr.mxu0 0.0
    %440 = vmatpush2.msra.mxu0 0.0
    %441 = vmatprep.subr.mxu0 0.0
    %442 = vmatpush2.msra.mxu0 0.0
    %443 = vmatprep.subr.mxu0 0.0
    %444 = vmatpush2.msra.mxu0 0.0
    %445 = vmatprep.subr.mxu0 0.0
    %446 = vmatpush2.msra.mxu0 0.0
    %447 = vmatprep.subr.mxu0 0.0
    %448 = vmatpush2.msra.mxu0 0.0
    %449 = vmatprep.subr.mxu0 0.0
    %450 = vmatpush2.msra.mxu0 0.0
    %451 = vmatprep.subr.mxu0 0.0
    %452 = vmatpush2.msra.mxu0 0.0
    %453 = vmatprep.subr.mxu0 0.0
    %454 = vmatpush2.msra.mxu0 0.0
    %455 = vmatprep.subr.mxu0 0.0
    %456 = vmatpush2.msra.mxu0 0.0
    %457 = vmatprep.subr.mxu0 0.0
    %458 = vmatpush2.msra.mxu0 0.0
    %459 = vmatprep.subr.mxu0 0.0
    %460 = vmatpush2.msra.mxu0 0.0
    %461 = vmatprep.subr.mxu0 0.0
    %462 = vmatpush2.msra.mxu0 0.0
    %463 = vmatprep.subr.mxu0 0.0
    %464 = vmatpush2.msra.mxu0 0.0
    %465 = vmatprep.mubr.f32.mxu0 0.0
    %v466 = vand.u32 %v142, 4294901760
    %v467 = vsub.f32 %v142, %v466
    %v468 = vand.u32 %v467, 4294901760
    %469 = vmatmul.mubr.f32.gmra.mxu0 %v468
    %v470 = vpop.f32.mrf.mxu0
    %v471 = vadd.f32 %v393, %v470
    %v472 = vpop.f32.mrf.mxu0
    %v473 = vadd.f32 %v395, %v472
    %474 = vdwg.mxu0
    %475 = vmatprep.subr.mxu0 0.0
    %476 = vmatpush1.msra.mxu0 0.0
    %477 = vmatprep.subr.mxu0 0.0
    %478 = vmatpush1.msra.mxu0 0.0
    %479 = vmatprep.subr.mxu0 0.0
    %480 = vmatpush1.msra.mxu0 0.0
    %481 = vmatprep.subr.mxu0 0.0
    %482 = vmatpush1.msra.mxu0 0.0
    %483 = vmatprep.subr.mxu0 0.0
    %484 = vmatpush1.msra.mxu0 0.0
    %485 = vmatprep.subr.mxu0 0.0
    %486 = vmatpush1.msra.mxu0 0.0
    %487 = vmatprep.subr.mxu0 0.0
    %488 = vmatpush1.msra.mxu0 0.0
    %489 = vmatprep.subr.mxu0 0.0
    %490 = vmatpush1.msra.mxu0 0.0
    %491 = vmatprep.subr.mxu0 0.0
    %492 = vmatpush1.msra.mxu0 0.0
    %493 = vmatprep.subr.mxu0 0.0
    %494 = vmatpush1.msra.mxu0 0.0
    %495 = vmatprep.subr.mxu0 0.0
    %496 = vmatpush1.msra.mxu0 0.0
    %497 = vmatprep.subr.mxu0 0.0
    %498 = vmatpush1.msra.mxu0 0.0
    %499 = vmatprep.subr.mxu0 0.0
    %500 = vmatpush1.msra.mxu0 0.0
    %501 = vmatprep.subr.mxu0 0.0
    %502 = vmatpush1.msra.mxu0 0.0
    %v503 = vand.u32 %v139, 4294901760
    %v504 = vsub.f32 %v139, %v503
    %v505 = vand.u32 %v504, 4294901760
    %506 = vmatprep.subr.mxu0 %v505
    %v507 = vand.u32 %v138, 4294901760
    %v508 = vsub.f32 %v138, %v507
    %v509 = vand.u32 %v508, 4294901760
    %510 = vmatpush1.msra.mxu0 %v509
    %v511 = vand.u32 %v137, 4294901760
    %v512 = vsub.f32 %v137, %v511
    %v513 = vand.u32 %v512, 4294901760
    %514 = vmatprep.subr.mxu0 %v513
    %v515 = vand.u32 %v136, 4294901760
    %v516 = vsub.f32 %v136, %v515
    %v517 = vand.u32 %v516, 4294901760
    %518 = vmatpush1.msra.mxu0 %v517
    %519 = vmatprep.subr.mxu0 0.0
    %520 = vmatpush2.msra.mxu0 0.0
    %521 = vmatprep.subr.mxu0 0.0
    %522 = vmatpush2.msra.mxu0 0.0
    %523 = vmatprep.subr.mxu0 0.0
    %524 = vmatpush2.msra.mxu0 0.0
    %525 = vmatprep.subr.mxu0 0.0
    %526 = vmatpush2.msra.mxu0 0.0
    %527 = vmatprep.subr.mxu0 0.0
    %528 = vmatpush2.msra.mxu0 0.0
    %529 = vmatprep.subr.mxu0 0.0
    %530 = vmatpush2.msra.mxu0 0.0
    %531 = vmatprep.subr.mxu0 0.0
    %532 = vmatpush2.msra.mxu0 0.0
    %533 = vmatprep.subr.mxu0 0.0
    %534 = vmatpush2.msra.mxu0 0.0
    %535 = vmatprep.subr.mxu0 0.0
    %536 = vmatpush2.msra.mxu0 0.0
    %537 = vmatprep.subr.mxu0 0.0
    %538 = vmatpush2.msra.mxu0 0.0
    %539 = vmatprep.subr.mxu0 0.0
    %540 = vmatpush2.msra.mxu0 0.0
    %541 = vmatprep.subr.mxu0 0.0
    %542 = vmatpush2.msra.mxu0 0.0
    %543 = vmatprep.subr.mxu0 0.0
    %544 = vmatpush2.msra.mxu0 0.0
    %545 = vmatprep.subr.mxu0 0.0
    %546 = vmatpush2.msra.mxu0 0.0
    %547 = vmatprep.subr.mxu0 0.0
    %548 = vmatpush2.msra.mxu0 0.0
    %549 = vmatprep.subr.mxu0 0.0
    %550 = vmatpush2.msra.mxu0 0.0
    %551 = vmatprep.mubr.f32.mxu0 0.0
    %v552 = vand.u32 %v142, 4294901760
    %553 = vmatmul.mubr.f32.gmra.mxu0 %v552
    %v554 = vpop.f32.mrf.mxu0
    %v555 = vadd.f32 %v471, %v554
    %v556 = vpop.f32.mrf.mxu0
    %v557 = vadd.f32 %v473, %v556
    %558 = vdwg.mxu0
    %559 = vmatprep.subr.mxu0 0.0
    %560 = vmatpush1.msra.mxu0 0.0
    %561 = vmatprep.subr.mxu0 0.0
    %562 = vmatpush1.msra.mxu0 0.0
    %563 = vmatprep.subr.mxu0 0.0
    %564 = vmatpush1.msra.mxu0 0.0
    %565 = vmatprep.subr.mxu0 0.0
    %566 = vmatpush1.msra.mxu0 0.0
    %567 = vmatprep.subr.mxu0 0.0
    %568 = vmatpush1.msra.mxu0 0.0
    %569 = vmatprep.subr.mxu0 0.0
    %570 = vmatpush1.msra.mxu0 0.0
    %571 = vmatprep.subr.mxu0 0.0
    %572 = vmatpush1.msra.mxu0 0.0
    %573 = vmatprep.subr.mxu0 0.0
    %574 = vmatpush1.msra.mxu0 0.0
    %575 = vmatprep.subr.mxu0 0.0
    %576 = vmatpush1.msra.mxu0 0.0
    %577 = vmatprep.subr.mxu0 0.0
    %578 = vmatpush1.msra.mxu0 0.0
    %579 = vmatprep.subr.mxu0 0.0
    %580 = vmatpush1.msra.mxu0 0.0
    %581 = vmatprep.subr.mxu0 0.0
    %582 = vmatpush1.msra.mxu0 0.0
    %583 = vmatprep.subr.mxu0 0.0
    %584 = vmatpush1.msra.mxu0 0.0
    %585 = vmatprep.subr.mxu0 0.0
    %586 = vmatpush1.msra.mxu0 0.0
    %v587 = vand.u32 %v139, 4294901760
    %588 = vmatprep.subr.mxu0 %v587
    %v589 = vand.u32 %v138, 4294901760
    %590 = vmatpush1.msra.mxu0 %v589
    %v591 = vand.u32 %v137, 4294901760
    %592 = vmatprep.subr.mxu0 %v591
    %v593 = vand.u32 %v136, 4294901760
    %594 = vmatpush1.msra.mxu0 %v593
    %595 = vmatprep.subr.mxu0 0.0
    %596 = vmatpush2.msra.mxu0 0.0
    %597 = vmatprep.subr.mxu0 0.0
    %598 = vmatpush2.msra.mxu0 0.0
    %599 = vmatprep.subr.mxu0 0.0
    %600 = vmatpush2.msra.mxu0 0.0
    %601 = vmatprep.subr.mxu0 0.0
    %602 = vmatpush2.msra.mxu0 0.0
    %603 = vmatprep.subr.mxu0 0.0
    %604 = vmatpush2.msra.mxu0 0.0
    %605 = vmatprep.subr.mxu0 0.0
    %606 = vmatpush2.msra.mxu0 0.0
    %607 = vmatprep.subr.mxu0 0.0
    %608 = vmatpush2.msra.mxu0 0.0
    %609 = vmatprep.subr.mxu0 0.0
    %610 = vmatpush2.msra.mxu0 0.0
    %611 = vmatprep.subr.mxu0 0.0
    %612 = vmatpush2.msra.mxu0 0.0
    %613 = vmatprep.subr.mxu0 0.0
    %614 = vmatpush2.msra.mxu0 0.0
    %615 = vmatprep.subr.mxu0 0.0
    %616 = vmatpush2.msra.mxu0 0.0
    %617 = vmatprep.subr.mxu0 0.0
    %618 = vmatpush2.msra.mxu0 0.0
    %619 = vmatprep.subr.mxu0 0.0
    %620 = vmatpush2.msra.mxu0 0.0
    %621 = vmatprep.subr.mxu0 0.0
    %622 = vmatpush2.msra.mxu0 0.0
    %623 = vmatprep.subr.mxu0 0.0
    %624 = vmatpush2.msra.mxu0 0.0
    %625 = vmatprep.subr.mxu0 0.0
    %626 = vmatpush2.msra.mxu0 0.0
    %627 = vmatprep.mubr.f32.mxu0 0.0
    %v628 = vand.u32 %v142, 4294901760
    %629 = vmatmul.mubr.f32.gmra.mxu0 %v628
    %v630 = vpop.f32.mrf.mxu0
    %v631 = vadd.f32 %v555, %v630
    %v632 = vpop.f32.mrf.mxu0
    %v633 = vadd.f32 %v557, %v632
    %634 = vdwg.mxu0
    %v635 = vcvt.s32.f32 %v112
    %s636 = smul.u32 %s99, 8
    %v637 = vstv %s636
    %v638 = vadd.s32 %v109, %v637
    %vm639 = vcmp.lt.s32.totalorder %v638, 8
    %v640 = vmax.f32 %v106, 0.0
    %v641 = vand.u32 2147483647, %v106
    %v642 = vsub.f32 0.0, %v641
    %v643 = vmul.f32 %v642, 1.442695
    %v644 = vpow.pop %v643
    %v645 = vadd.f32 %v644, 1.0
    %v646 = vlog2.pop %v645
    %v647 = vmul.f32 %v646, 0.6931472
    %v648 = vmul.f32 -0.5, %v644
    %v649 = vadd.f32 %v648, 1.0
    %v650 = vmul.f32 %v649, %v644
    %v651 = vand.u32 2147483647, %v644
    %vm652 = vcmp.lt.f32.partialorder %v651, 0.0004427343
    %v653 = vsel %vm652, %v650, %v647
    %v654 = vadd.f32 %v640, %v653
    %vm655 = vcmp.le.f32.partialorder %v635, %v631
    %v656 = vsel %vm639, 1, 0
    %vm657 = vcmp.eq.s32.totalorder %v656, 1
    %vm658 = vmand %vm655, %vm657
    %v659 = vsel %vm658, %v654, 0.0
    %vm660 = vcmp.eq.f32.partialorder %v635, %v631
    %vm661 = vmand %vm660, %vm657
    %v662 = vmul.f32 %v633, %v106
    %v663 = vsel %vm661, %v662, 0.0
    %v664 = vsub.f32 %v659, %v663
    %665 = vadd.xlane.f32.xlu0 %v664
    %v666 = vpop.xlane.xlu0 %665
    %v667 = vrot.slane %v666, 4
    %v668 = vadd.f32 %v666, %v667
    %v669 = vrot.slane %v668, 2
    %v670 = vadd.f32 %v668, %v669
    %v671 = vrot.slane %v670, 1
    %v672 = vadd.f32 %v670, %v671
    %s673 = vtos %v672
    %v674 = vld [vmem:[#allocation8] sm:$0xff]
    %v675 = vld [vmem:[#allocation8 + $0x8] sm:$0xff]
    %v676 = vld [vmem:[#allocation8 + $0x10] sm:$0xff]
    %v677 = vld [vmem:[#allocation8 + $0x18] sm:$0xff]
    %v678 = vld [vmem:[#allocation9] sm:$0xff]
    %v679 = vld [vmem:[#allocation9 + $0x8] sm:$0xff]
    %v680 = vld [vmem:[#allocation9 + $0x10] sm:$0xff]
    %v681 = vld [vmem:[#allocation9 + $0x18] sm:$0xff]
    %v682 = vsub.f32 %v674, %v678
    %v683 = vsub.f32 %v675, %v679
    %v684 = vsub.f32 %v676, %v680
    %v685 = vsub.f32 %v677, %v681
    %v686 = vmul.f32 %v682, %v682
    %v687 = vmul.f32 %v683, %v683
    %v688 = vmul.f32 %v684, %v684
    %v689 = vmul.f32 %v685, %v685
    %v690 = vsel %vm657, %v686, 0.0
    %v691 = vsel %vm657, %v687, 0.0
    %v692 = vsel %vm657, %v688, 0.0
    %v693 = vsel %vm657, %v689, 0.0
    %v694 = vadd.f32 %v690, %v691
    %v695 = vadd.f32 %v694, %v692
    %v696 = vadd.f32 %v695, %v693
    %697 = vadd.xlane.f32.xlu0 %v696
    %v698 = vpop.xlane.xlu0 %697
    %v699 = vrot.slane %v698, 4
    %v700 = vadd.f32 %v698, %v699
    %v701 = vrot.slane %v700, 2
    %v702 = vadd.f32 %v700, %v701
    %v703 = vrot.slane %v702, 1
    %v704 = vadd.f32 %v702, %v703
    %s705 = vtos %v704
    %s706 = sld [smem:[#allocation2]]
    %s707 = smul.f32 %s673, 0.0109375
    %s708 = smul.f32 %s705, 7.324219e-05
    %s709 = sadd.f32 %s707, %s708
    %s710 = sadd.f32 %s706, %s709
    %s711 = scalar_lea.smem [#allocation2], 0
    %712 = sst [smem:[%s711]] %s710
    // Predicated region
    $region38: #{tpu_custom_call.1} parent=1 // pred_check
      %p713 = pneg %p100
    $region39: #{tpu_custom_call.1} parent=1 // pred_check_branch
      %715 = sbr.rel (%p713) target = $region41
    $region40: #{tpu_custom_call.1} parent=1 // pred_region
      %s716 = sld [smem:[#allocation2]]
      %v717 = vstv %s716
      %718 = vst [vmem:[#allocation11] sm:$0xff] %v717
    $region41: #{tpu_custom_call.1} parent=1 // pred_fallthru
      _
    // Predicated region
    $region42: #{tpu_custom_call.1} parent=1 // pred_check
      _
    $region43: #{tpu_custom_call.1} parent=1 // pred_check_branch
      %720 = sbr.rel (0) target = $region45
    $region44: #{tpu_custom_call.1} parent=1 // pred_region
      %s722 = ssub.s32 128, 128
      %723 = vsyncadd [#allocation5], %s722
      %s725 = sshll.u32 [#allocation11], 4
      %s726 = int_to_ptr.vmem [resolvable:$true] %s725
      %728 = dma.vmem_to_hbm [thread:$0]  %s726, 128, %s4, [#allocation5]
    $region45: #{tpu_custom_call.1} parent=1 // pred_fallthru
      _
    // Predicated region
    $region46: #{tpu_custom_call.1} parent=1 // pred_check
      _
    $region47: #{tpu_custom_call.1} parent=1 // pred_check_branch
      %730 = sbr.rel (0) target = $region49
    $region48: #{tpu_custom_call.1} parent=1 // pred_region
      %731 = dma.done [#allocation5], 128
    $region49: #{tpu_custom_call.1} parent=1 // pred_fallthru
      _
    %732 = vsyncpa [#allocation4], 1
    %733 = vsyncpa [#allocation7], 1
    %734 = vsyncpa [#allocation10], 1
    %735 = vsyncpa [#allocation5], 1

</llo_original>
